<compile_context>
chip_gen: v7x
topology: tpu7x:2x2x1
jax: 0.10.0
libtpu: 0.0.40
codegen_flags: <defaults>
</compile_context>

<pallas_src>
import functools

import jax
import jax.numpy as jnp
from jax import lax
from jax.experimental import pallas as pl
from jax.experimental.pallas import tpu as pltpu


def _round_up(x, m):
    return ((x + m - 1) // m) * m


# --------------------------------------------------------------------------
# Pallas kernel: full TemporalBlock forward for one packed batch block.
# --------------------------------------------------------------------------
def _temporal_block_kernel(x_ref, w1_ref, b1_ref, w2_ref, b2_ref, o_ref, *,
                           L, k, dilation, has_downsample, compute_dtype):
    """One grid step over NB batch elements packed side-by-side on lanes.

    x_ref : (C_in,  NLP)       compute dtype   (NLP = NB*L rounded up to 128)
    w1_ref: (Cw,    k*C_in)    compute dtype   (Cw = 2*C_out if downsample fused)
    b1_ref: (Cw, 1)            f32             (conv1 bias [+ downsample bias])
    w2_ref: (C_out, k*C_out)   compute dtype
    b2_ref: (C_out, 1)         f32
    o_ref : (C_out, NLP)       output dtype
    """
    NLP = x_ref.shape[-1]
    C_out = w2_ref.shape[0]

    # Lane position within its own packed batch element.  Lanes whose shifted
    # source would cross an element boundary (or come from the trailing lane
    # pad) are masked to zero -> exact causal left-padding, no padded copies.
    pos = lax.broadcasted_iota(jnp.int32, (1, NLP), 1) % L

    xf = x_ref[...].astype(jnp.float32)                    # (C_in, NLP)

    def im2col(v):
        """(C, NLP) f32 -> (k*C, NLP) f32: k causally shifted views."""
        cols = []
        for t in range(k):
            s = (k - 1 - t) * dilation                     # tap t looks back s
            if s == 0:
                cols.append(v)
            elif s >= L:
                cols.append(jnp.zeros_like(v))             # reaches before t=0
            else:
                shifted = pltpu.roll(v, shift=s, axis=1)   # XLU lane rotate
                cols.append(jnp.where(pos >= s, shifted, jnp.zeros_like(v)))
        return jnp.concatenate(cols, axis=0) if k > 1 else cols[0]

    # ---- conv1 (+ fused 1x1 downsample) + bias: one MXU matmul ----
    x_cat = im2col(xf).astype(compute_dtype)               # (k*C_in, NLP)
    z = jnp.dot(w1_ref[...], x_cat, preferred_element_type=jnp.float32)
    z = z + b1_ref[...]                                    # (Cw, NLP) f32

    if has_downsample:
        h = jnp.maximum(z[:C_out], 0.0)                    # conv1 -> ReLU
        res = z[C_out:]                                    # downsample(x)+bias
    else:
        h = jnp.maximum(z, 0.0)
        res = xf                                           # identity residual

    # ---- conv2 + bias + ReLU (dropout1/2 are identity in eval mode) ----
    h_cat = im2col(h).astype(compute_dtype)                # (k*C_out, NLP)
    out = jnp.dot(w2_ref[...], h_cat, preferred_element_type=jnp.float32)
    out = jnp.maximum(out + b2_ref[...], 0.0)

    # ---- residual add + final ReLU ----
    o_ref[...] = jnp.maximum(out + res, 0.0).astype(o_ref.dtype)


# --------------------------------------------------------------------------
# Wrapper: batch packing, weight massaging, pallas_call.
# --------------------------------------------------------------------------
def temporal_block_forward(x_ncl, params, *, kernel_size, dilation, padding,
                           compute_dtype=jnp.bfloat16,
                           target_lanes=512, vmem_budget_bytes=24 << 20):
    """x_ncl: (N, C_in, L), PyTorch layout.  Returns (N, C_out, L)."""
    assert padding == (kernel_size - 1) * dilation, \
        "TCN TemporalBlock expects padding == (kernel_size - 1) * dilation"
    w1, b1, w2, b2, wd, bd = (params["w1"], params["b1"], params["w2"],
                              params["b2"], params["wd"], params["bd"])
    N, C_in, L = x_ncl.shape
    C_out = w1.shape[0]
    k = kernel_size
    has_downsample = wd is not None
    Cw = 2 * C_out if has_downsample else C_out

    # ---- choose how many batch elements to pack per grid step ----
    itemsize_c = jnp.dtype(compute_dtype).itemsize
    itemsize_o = jnp.dtype(x_ncl.dtype).itemsize
    # rough per-lane VMEM bytes of everything live inside one grid step
    per_lane = (2 * C_in * itemsize_c                       # x block (2x buf)
                + (k * C_in + k * C_out) * 4                # im2col assembly f32
                + (k * C_in + k * C_out) * itemsize_c       # casted im2col tiles
                + (Cw + 2 * C_out) * 4                      # z, h, out (f32)
                + 2 * C_out * itemsize_o)                   # out block (2x buf)
    nb = max(1, min(N, max(target_lanes, 128) // max(L, 1)))
    while nb > 1 and _round_up(nb * L, 128) * per_lane > vmem_budget_bytes:
        nb -= 1
    # TODO(synk): if even nb == 1 exceeds the budget (very long L), tile L with
    #             a `padding` halo carried in VMEM scratch instead.

    G = -(-N // nb)                 # grid steps
    Np = G * nb                     # padded batch
    NL = nb * L                     # real packed lanes per step
    NLP = _round_up(NL, 128)        # lane-dense block width

    # ---- pack x: (N, C_in, L) -> (G, C_in, NLP), batch elements on lanes ----
    xp = x_ncl
    if Np != N:
        xp = jnp.pad(xp, ((0, Np - N), (0, 0), (0, 0)))
    xp = xp.reshape(G, nb, C_in, L).transpose(0, 2, 1, 3).reshape(G, C_in, NL)
    if NLP != NL:
        xp = jnp.pad(xp, ((0, 0), (0, 0), (0, NLP - NL)))
    xp = xp.astype(compute_dtype)

    # ---- weights: torch (C_out, C_in, k) -> (C_out, k*C_in), tap-major; the
    # 1x1 downsample is stacked as extra rows in the zero-shift tap block. ----
    w1_mat = jnp.transpose(w1, (0, 2, 1)).reshape(C_out, k * C_in)
    if has_downsample:
        wd_row = jnp.concatenate(
            [jnp.zeros((C_out, (k - 1) * C_in), w1.dtype), wd[:, :, 0]], axis=1)
        w1_stack = jnp.concatenate([w1_mat, wd_row], axis=0)       # (2*C_out, k*C_in)
        b1_stack = jnp.concatenate([b1, bd]).reshape(Cw, 1)
    else:
        w1_stack = w1_mat
        b1_stack = b1.reshape(Cw, 1)
    w2_mat = jnp.transpose(w2, (0, 2, 1)).reshape(C_out, k * C_out)

    inputs = [xp,
              w1_stack.astype(compute_dtype), b1_stack.astype(jnp.float32),
              w2_mat.astype(compute_dtype),
              b2.reshape(C_out, 1).astype(jnp.float32)]
    in_specs = [
        pl.BlockSpec((None, C_in, NLP), lambda g: (g, 0, 0)),
        pl.BlockSpec((Cw, k * C_in), lambda g: (0, 0)),
        pl.BlockSpec((Cw, 1), lambda g: (0, 0)),
        pl.BlockSpec((C_out, k * C_out), lambda g: (0, 0)),
        pl.BlockSpec((C_out, 1), lambda g: (0, 0)),
    ]

    kernel = functools.partial(
        _temporal_block_kernel, L=L, k=k, dilation=dilation,
        has_downsample=has_downsample, compute_dtype=compute_dtype)

    weight_bytes = ((Cw * k * C_in + C_out * k * C_out) * itemsize_c
                    + (Cw + C_out) * 4)
    vmem_limit = int(min(max(2 * (NLP * per_lane + weight_bytes) + (2 << 20),
                             32 << 20), 64 << 20))

    out = pl.pallas_call(
        kernel,
        out_shape=jax.ShapeDtypeStruct((G, C_out, NLP), x_ncl.dtype),
        grid_spec=pltpu.PrefetchScalarGridSpec(
            num_scalar_prefetch=0,
            grid=(G,),
            in_specs=in_specs,
            out_specs=pl.BlockSpec((None, C_out, NLP), lambda g: (g, 0, 0)),
        ),
        compiler_params=pltpu.CompilerParams(
            dimension_semantics=("parallel",),     # batch blocks independent
            vmem_limit_bytes=vmem_limit),
    )(*inputs)

    # ---- unpack: (G, C_out, NLP) -> (N, C_out, L) ----
    out = out[:, :, :NL].reshape(G, C_out, nb, L).transpose(0, 2, 1, 3)
    out = out.reshape(Np, C_out, L)[:N]
    return out


# --------------------------------------------------------------------------
# Deterministic parameter construction (synthetic; mirrors module shapes)
# --------------------------------------------------------------------------
def _weight_norm_effective(v, g):
    # PyTorch weight_norm, dim=0: w = g * v / ||v||, norm over (C_in, k)
    norm = jnp.sqrt(jnp.sum(v * v, axis=(1, 2), keepdims=True))
    return (g[:, None, None] / norm) * v


def make_params(key, n_inputs, n_outputs, kernel_size):
    ks = jax.random.split(key, 6)
    v1 = 0.01 * jax.random.normal(ks[0], (n_outputs, n_inputs, kernel_size), jnp.float32)
    v2 = 0.01 * jax.random.normal(ks[1], (n_outputs, n_outputs, kernel_size), jnp.float32)
    g1 = jnp.sqrt(jnp.sum(v1 * v1, axis=(1, 2)))   # weight_norm sets g = ||v||
    g2 = jnp.sqrt(jnp.sum(v2 * v2, axis=(1, 2)))
    w1 = _weight_norm_effective(v1, g1)
    w2 = _weight_norm_effective(v2, g2)
    b1 = 0.01 * jax.random.normal(ks[2], (n_outputs,), jnp.float32)
    b2 = 0.01 * jax.random.normal(ks[3], (n_outputs,), jnp.float32)
    if n_inputs != n_outputs:
        wd = 0.01 * jax.random.normal(ks[4], (n_outputs, n_inputs, 1), jnp.float32)
        bd = 0.01 * jax.random.normal(ks[5], (n_outputs,), jnp.float32)
    else:
        wd, bd = None, None
    return dict(w1=w1, b1=b1, w2=w2, b2=b2, wd=wd, bd=bd)


# --------------------------------------------------------------------------
# Pure-JAX reference (lax.conv) for correctness checks
# --------------------------------------------------------------------------
def reference_forward(x, params, *, kernel_size, dilation, padding):
    def conv(inp, w, b, pad, dil):
        y = lax.conv_general_dilated(
            inp, w, window_strides=(1,), padding=[(pad, pad)],
            rhs_dilation=(dil,), dimension_numbers=("NCH", "OIH", "NCH"))
        return y + b[None, :, None]

    h = conv(x, params["w1"], params["b1"], padding, dilation)
    if padding > 0:
        h = h[:, :, :-padding]
    h = jnp.maximum(h, 0.0)
    o = conv(h, params["w2"], params["b2"], padding, dilation)
    if padding > 0:
        o = o[:, :, :-padding]
    o = jnp.maximum(o, 0.0)
    if params["wd"] is not None:
        res = conv(x, params["wd"], params["bd"], 0, 1)
    else:
        res = x
    return jnp.maximum(o + res, 0.0)


def _run_case(key, N, C_in, C_out, L, kernel_size, dilation,
              compute_dtype, atol, rtol):
    padding = (kernel_size - 1) * dilation
    kx, kp = jax.random.split(key)
    x = jax.random.normal(kx, (N, C_in, L), jnp.float32)   # NCL, like PyTorch
    params = make_params(kp, C_in, C_out, kernel_size)
    out = temporal_block_forward(
        x, params, kernel_size=kernel_size, dilation=dilation, padding=padding,
        compute_dtype=compute_dtype)
    out = jax.block_until_ready(out)
    ref = reference_forward(
        x, params, kernel_size=kernel_size, dilation=dilation, padding=padding)
    assert out.shape == (N, C_out, L), out.shape
    err = float(jnp.max(jnp.abs(out - ref)))
    assert jnp.allclose(out, ref, atol=atol, rtol=rtol), err


if __name__ == "__main__":
    KERNEL_SIZE, DILATION = 3, 2
    key = jax.random.PRNGKey(0)
    k1, k2, k3, k4 = jax.random.split(key, 4)

    # f32 compute path: exact algebra check against the lax.conv reference
    _run_case(k1, 2, 8, 16, 24, KERNEL_SIZE, DILATION, jnp.float32, 1e-4, 1e-4)   # downsample
    _run_case(k2, 2, 16, 16, 24, KERNEL_SIZE, DILATION, jnp.float32, 1e-4, 1e-4)  # identity res

    # bf16 compute path (default on-MXU dtype): multi-step grid, batch padding,
    # lane padding (N=5 -> nb=2, G=3; L=200 -> 400 lanes padded to 512).
    _run_case(k3, 5, 8, 16, 200, KERNEL_SIZE, DILATION, jnp.bfloat16, 1e-2, 5e-2)  # downsample
    _run_case(k4, 4, 16, 16, 24, KERNEL_SIZE, DILATION, jnp.bfloat16, 3e-2, 5e-2)  # identity res

    print("KERNEL_OK")
</pallas_src>

<mosaic_0001>
module attributes {stable_mosaic.version = 11 : i64} {
  func.func @_temporal_block_kernel(%arg0: i32, %arg1: memref<1x8x128xf32, #tpu.memory_space<vmem>>, %arg2: memref<32x24xf32, #tpu.memory_space<vmem>>, %arg3: memref<32x1xf32, #tpu.memory_space<vmem>>, %arg4: memref<16x48xf32, #tpu.memory_space<vmem>>, %arg5: memref<16x1xf32, #tpu.memory_space<vmem>>, %arg6: memref<1x16x128xf32, #tpu.memory_space<vmem>>) attributes {dimension_semantics = [#tpu.dimension_semantics<parallel>], iteration_bounds = array<i64: 1>, scalar_prefetch = 0 : i64, scratch_operands = 0 : i64, tpu.core_type = #tpu.core_type<tc>, window_params = [{transform_indices = @transform_0, window_bounds = array<i64: 1, 8, 128>}, {pipeline_mode = #tpu.pipeline_mode<synchronous>, transform_indices = @transform_1, window_bounds = array<i64: 32, 24>}, {pipeline_mode = #tpu.pipeline_mode<synchronous>, transform_indices = @transform_2, window_bounds = array<i64: 32, 1>}, {pipeline_mode = #tpu.pipeline_mode<synchronous>, transform_indices = @transform_3, window_bounds = array<i64: 16, 48>}, {pipeline_mode = #tpu.pipeline_mode<synchronous>, transform_indices = @transform_4, window_bounds = array<i64: 16, 1>}, {transform_indices = @transform_5, window_bounds = array<i64: 1, 16, 128>}]} {
    %0 = tpu.iota {dimensions = array<i32: 1>} : vector<1x128xi32>
    %c24_i32 = arith.constant 24 : i32
    %c0_i32 = arith.constant 0 : i32
    %1 = arith.cmpi eq, %c24_i32, %c0_i32 : i32
    %c1_i32 = arith.constant 1 : i32
    %2 = arith.select %1, %c1_i32, %c24_i32 : i32
    %3 = vector.broadcast %2 : i32 to vector<1x128xi32>
    %4 = arith.remsi %0, %3 : vector<1x128xi32>
    %c0_i32_0 = arith.constant 0 : i32
    %5 = vector.broadcast %c0_i32_0 : i32 to vector<1x128xi32>
    %6 = arith.cmpi ne, %4, %5 : vector<1x128xi32>
    %c0_i32_1 = arith.constant 0 : i32
    %7 = vector.broadcast %c0_i32_1 : i32 to vector<1x128xi32>
    %8 = arith.cmpi slt, %4, %7 : vector<1x128xi32>
    %c0_i32_2 = arith.constant 0 : i32
    %9 = arith.cmpi slt, %2, %c0_i32_2 : i32
    %10 = vector.broadcast %9 : i1 to vector<1x128xi1>
    %11 = vector.broadcast %10 : vector<1x128xi1> to vector<1x128xi1>
    %12 = arith.xori %8, %11 : vector<1x128xi1>
    %13 = arith.andi %12, %6 : vector<1x128xi1>
    %14 = vector.broadcast %2 : i32 to vector<1x128xi32>
    %15 = arith.addi %4, %14 : vector<1x128xi32>
    %16 = arith.select %13, %15, %4 : vector<1x128xi1>, vector<1x128xi32>
    %c0 = arith.constant 0 : index
    %c0_3 = arith.constant 0 : index
    %c0_4 = arith.constant 0 : index
    %17 = vector.load %arg1[%c0, %c0_3, %c0_4] : memref<1x8x128xf32, #tpu.memory_space<vmem>>, vector<1x8x128xf32>
    %18 = vector.shape_cast %17 : vector<1x8x128xf32> to vector<8x128xf32>
    %c4_i32 = arith.constant 4 : i32
    %19 = tpu.dynamic_rotate %18 by %c4_i32 dim 1 : vector<8x128xf32>, i32 -> vector<8x128xf32>
    %c4_i32_5 = arith.constant 4 : i32
    %20 = vector.broadcast %c4_i32_5 : i32 to vector<1x128xi32>
    %21 = arith.cmpi sge, %16, %20 : vector<1x128xi32>
    %cst = arith.constant 0.000000e+00 : f32
    %22 = vector.broadcast %cst : f32 to vector<8x128xf32>
    %23 = vector.shape_cast %21 : vector<1x128xi1> to vector<1x128xi1>
    %24 = vector.broadcast %23 : vector<1x128xi1> to vector<8x128xi1>
    %25 = arith.select %24, %19, %22 : vector<8x128xi1>, vector<8x128xf32>
    %c2_i32 = arith.constant 2 : i32
    %26 = tpu.dynamic_rotate %18 by %c2_i32 dim 1 : vector<8x128xf32>, i32 -> vector<8x128xf32>
    %c2_i32_6 = arith.constant 2 : i32
    %27 = vector.broadcast %c2_i32_6 : i32 to vector<1x128xi32>
    %28 = arith.cmpi sge, %16, %27 : vector<1x128xi32>
    %cst_7 = arith.constant 0.000000e+00 : f32
    %29 = vector.broadcast %cst_7 : f32 to vector<8x128xf32>
    %30 = vector.shape_cast %28 : vector<1x128xi1> to vector<1x128xi1>
    %31 = vector.broadcast %30 : vector<1x128xi1> to vector<8x128xi1>
    %32 = arith.select %31, %26, %29 : vector<8x128xi1>, vector<8x128xf32>
    %33 = tpu.concatenate %25, %32, %18 in 0 : vector<8x128xf32>, vector<8x128xf32>, vector<8x128xf32> -> vector<24x128xf32>
    %c0_8 = arith.constant 0 : index
    %c0_9 = arith.constant 0 : index
    %34 = vector.load %arg2[%c0_8, %c0_9] : memref<32x24xf32, #tpu.memory_space<vmem>>, vector<32x24xf32>
    %cst_10 = arith.constant dense<0.000000e+00> : vector<32x128xf32>
    %35 = tpu.matmul %34, %33, %cst_10 {dimension_numbers = #tpu.dot_dimension_numbers<[1], [0], [0], [1], [0, 0, 1, 1], [], []>} : vector<32x24xf32>, vector<24x128xf32>, vector<32x128xf32> -> vector<32x128xf32>
    %c0_11 = arith.constant 0 : index
    %c0_12 = arith.constant 0 : index
    %36 = vector.load %arg3[%c0_11, %c0_12] : memref<32x1xf32, #tpu.memory_space<vmem>>, vector<32x1xf32>
    %37 = vector.broadcast %36 : vector<32x1xf32> to vector<32x128xf32>
    %38 = arith.addf %35, %37 : vector<32x128xf32>
    %39 = vector.extract_strided_slice %38 {offsets = [0, 0], sizes = [16, 128], strides = [1, 1]} : vector<32x128xf32> to vector<16x128xf32>
    %cst_13 = arith.constant 0.000000e+00 : f32
    %40 = vector.broadcast %cst_13 : f32 to vector<16x128xf32>
    %41 = arith.maximumf %39, %40 : vector<16x128xf32>
    %42 = vector.extract_strided_slice %38 {offsets = [16, 0], sizes = [16, 128], strides = [1, 1]} : vector<32x128xf32> to vector<16x128xf32>
    %c4_i32_14 = arith.constant 4 : i32
    %43 = tpu.dynamic_rotate %41 by %c4_i32_14 dim 1 : vector<16x128xf32>, i32 -> vector<16x128xf32>
    %c4_i32_15 = arith.constant 4 : i32
    %44 = vector.broadcast %c4_i32_15 : i32 to vector<1x128xi32>
    %45 = arith.cmpi sge, %16, %44 : vector<1x128xi32>
    %cst_16 = arith.constant 0.000000e+00 : f32
    %46 = vector.broadcast %cst_16 : f32 to vector<16x128xf32>
    %47 = vector.shape_cast %45 : vector<1x128xi1> to vector<1x128xi1>
    %48 = vector.broadcast %47 : vector<1x128xi1> to vector<16x128xi1>
    %49 = arith.select %48, %43, %46 : vector<16x128xi1>, vector<16x128xf32>
    %c2_i32_17 = arith.constant 2 : i32
    %50 = tpu.dynamic_rotate %41 by %c2_i32_17 dim 1 : vector<16x128xf32>, i32 -> vector<16x128xf32>
    %c2_i32_18 = arith.constant 2 : i32
    %51 = vector.broadcast %c2_i32_18 : i32 to vector<1x128xi32>
    %52 = arith.cmpi sge, %16, %51 : vector<1x128xi32>
    %cst_19 = arith.constant 0.000000e+00 : f32
    %53 = vector.broadcast %cst_19 : f32 to vector<16x128xf32>
    %54 = vector.shape_cast %52 : vector<1x128xi1> to vector<1x128xi1>
    %55 = vector.broadcast %54 : vector<1x128xi1> to vector<16x128xi1>
    %56 = arith.select %55, %50, %53 : vector<16x128xi1>, vector<16x128xf32>
    %57 = tpu.concatenate %49, %56, %41 in 0 : vector<16x128xf32>, vector<16x128xf32>, vector<16x128xf32> -> vector<48x128xf32>
    %c0_20 = arith.constant 0 : index
    %c0_21 = arith.constant 0 : index
    %58 = vector.load %arg4[%c0_20, %c0_21] : memref<16x48xf32, #tpu.memory_space<vmem>>, vector<16x48xf32>
    %cst_22 = arith.constant dense<0.000000e+00> : vector<16x128xf32>
    %59 = tpu.matmul %58, %57, %cst_22 {dimension_numbers = #tpu.dot_dimension_numbers<[1], [0], [0], [1], [0, 0, 1, 1], [], []>} : vector<16x48xf32>, vector<48x128xf32>, vector<16x128xf32> -> vector<16x128xf32>
    %c0_23 = arith.constant 0 : index
    %c0_24 = arith.constant 0 : index
    %60 = vector.load %arg5[%c0_23, %c0_24] : memref<16x1xf32, #tpu.memory_space<vmem>>, vector<16x1xf32>
    %61 = vector.broadcast %60 : vector<16x1xf32> to vector<16x128xf32>
    %62 = arith.addf %59, %61 : vector<16x128xf32>
    %cst_25 = arith.constant 0.000000e+00 : f32
    %63 = vector.broadcast %cst_25 : f32 to vector<16x128xf32>
    %64 = arith.maximumf %62, %63 : vector<16x128xf32>
    %65 = arith.addf %64, %42 : vector<16x128xf32>
    %cst_26 = arith.constant 0.000000e+00 : f32
    %66 = vector.broadcast %cst_26 : f32 to vector<16x128xf32>
    %67 = arith.maximumf %65, %66 : vector<16x128xf32>
    %c0_27 = arith.constant 0 : index
    %c0_28 = arith.constant 0 : index
    %c0_29 = arith.constant 0 : index
    %68 = vector.load %arg6[%c0_27, %c0_28, %c0_29] : memref<1x16x128xf32, #tpu.memory_space<vmem>>, vector<1x16x128xf32>
    %69 = vector.shape_cast %68 : vector<1x16x128xf32> to vector<16x128xf32>
    %70 = vector.shape_cast %67 : vector<16x128xf32> to vector<1x16x128xf32>
    tpu.vector_store %arg6[%c0_27, %c0_28, %c0_29], %70 {strides = array<i32>} : memref<1x16x128xf32, #tpu.memory_space<vmem>>, vector<1x16x128xf32>,
    return
  }
  func.func @transform_0(%arg0: i32) -> (i32, i32, i32) {
    %c0_i32 = arith.constant 0 : i32
    %c0_i32_0 = arith.constant 0 : i32
    %c0_i32_1 = arith.constant 0 : i32
    return %arg0, %c0_i32, %c0_i32_0 : i32, i32, i32
  }
  func.func @transform_1(%arg0: i32) -> (i32, i32) {
    %c0_i32 = arith.constant 0 : i32
    %c0_i32_0 = arith.constant 0 : i32
    %c0_i32_1 = arith.constant 0 : i32
    return %c0_i32, %c0_i32_0 : i32, i32
  }
  func.func @transform_2(%arg0: i32) -> (i32, i32) {
    %c0_i32 = arith.constant 0 : i32
    %c0_i32_0 = arith.constant 0 : i32
    %c0_i32_1 = arith.constant 0 : i32
    return %c0_i32, %c0_i32_0 : i32, i32
  }
  func.func @transform_3(%arg0: i32) -> (i32, i32) {
    %c0_i32 = arith.constant 0 : i32
    %c0_i32_0 = arith.constant 0 : i32
    %c0_i32_1 = arith.constant 0 : i32
    return %c0_i32, %c0_i32_0 : i32, i32
  }
  func.func @transform_4(%arg0: i32) -> (i32, i32) {
    %c0_i32 = arith.constant 0 : i32
    %c0_i32_0 = arith.constant 0 : i32
    %c0_i32_1 = arith.constant 0 : i32
    return %c0_i32, %c0_i32_0 : i32, i32
  }
  func.func @transform_5(%arg0: i32) -> (i32, i32, i32) {
    %c0_i32 = arith.constant 0 : i32
    %c0_i32_0 = arith.constant 0 : i32
    %c0_i32_1 = arith.constant 0 : i32
    return %arg0, %c0_i32, %c0_i32_0 : i32, i32, i32
  }
}

</mosaic_0001>

<llo_original>
// kernel: tpu_custom_call.1
$region0: #{tpu_custom_call.1}
  #allocation0 [shape = 'u32[]', space=smem, size = 0x4, offset = 0x4, fixed_abs, tag = 'smem constant byte address 0x4 - core index']
  #allocation1 [shape = 'u32[144,128]{1,0:T(1,128)}', space=vmem, size = 0x12000, scoped, tag = 'internal scratch']
  %s0 = inlined_call_operand.vmem [shape: f32[1,8,128], index: 0, kind: input, shape index: {}]
  %s1 = inlined_call_operand.vmem [shape: f32[32,24], index: 1, kind: input, shape index: {}]
  %s2 = inlined_call_operand.vmem [shape: f32[32,1], index: 2, kind: input, shape index: {}]
  %s3 = inlined_call_operand.vmem [shape: f32[16,48], index: 3, kind: input, shape index: {}]
  %s4 = inlined_call_operand.vmem [shape: f32[16,1], index: 4, kind: input, shape index: {}]
  %s5 = inlined_call_operand.hbm [shape: f32[1,16,128], index: 5, kind: output, shape index: {}]
  %s6 = sld [smem:[#allocation0]]
  $region30: #{tpu_custom_call.1} parent=0
    _
  %s8 = ssub.s32 1, %s6
  %s9 = scalar_select 0, %s8, %s6
  $region1: #{tpu_custom_call.1} parent=0
    #allocation2 [shape = 'u8[8192]{0}', space=vmem, size = 0x2000, scoped, tag = 'output window, operand 0, single buffered']
    #allocation3 [shape = 's32[1]{0}', space=sflag, size = 0x4, scoped, tag = 'scoped memory for tpu_custom_call.1']
    %10 = vsyncpa [#allocation3], 0
    // Predicated region
    $region2: #{tpu_custom_call.1} parent=1 // pred_check
      _
    $region3: #{tpu_custom_call.1} parent=1 // pred_check_branch
      %12 = sbr.rel (0) target = $region5
    $region4: #{tpu_custom_call.1} parent=1 // pred_region
      _
    $region5: #{tpu_custom_call.1} parent=1 // pred_fallthru
      _
    // Predicated region
    $region6: #{tpu_custom_call.1} parent=1 // pred_check
      _
    $region7: #{tpu_custom_call.1} parent=1 // pred_check_branch
      %14 = sbr.rel (0) target = $region9
    $region8: #{tpu_custom_call.1} parent=1 // pred_region
      _
    $region9: #{tpu_custom_call.1} parent=1 // pred_fallthru
      _
    // Predicated region
    $region10: #{tpu_custom_call.1} parent=1 // pred_check
      _
    $region11: #{tpu_custom_call.1} parent=1 // pred_check_branch
      %16 = sbr.rel (0) target = $region13
    $region12: #{tpu_custom_call.1} parent=1 // pred_region
      _
    $region13: #{tpu_custom_call.1} parent=1 // pred_fallthru
      _
    // Predicated region
    $region14: #{tpu_custom_call.1} parent=1 // pred_check
      _
    $region15: #{tpu_custom_call.1} parent=1 // pred_check_branch
      %18 = sbr.rel (0) target = $region17
    $region16: #{tpu_custom_call.1} parent=1 // pred_region
      _
    $region17: #{tpu_custom_call.1} parent=1 // pred_fallthru
      _
    // Predicated region
    $region18: #{tpu_custom_call.1} parent=1 // pred_check
      _
    $region19: #{tpu_custom_call.1} parent=1 // pred_check_branch
      %20 = sbr.rel (0) target = $region21
    $region20: #{tpu_custom_call.1} parent=1 // pred_region
      _
    $region21: #{tpu_custom_call.1} parent=1 // pred_fallthru
      _
    %v21 = vlaneseq
    %v22 = vand.u32 %v21, 127
    %vm23 = vcmp.lt.s32.totalorder %v22, 0
    %v24 = vsub.s32 0, %v22
    %v25 = vsel %vm23, %v24, %v22
    %v26 = vmul.u32.u64.compose %v25, 2863311531
    %v27 = vextract.low.u32 %v26
    %v28 = vextract.high.u32 %v26
    %v29 = vshrl.u32 %v28, 4
    %v30 = vmul.u32 %v29, 24
    %v31 = vsub.s32 %v25, %v30
    %v32 = vsub.s32 0, %v31
    %v33 = vsel %vm23, %v32, %v31
    %vm34 = vcmp.ne.s32.totalorder %v33, 0
    %vm35 = vcmp.lt.s32.totalorder %v33, 0
    %vm36 = vmand %vm35, %vm34
    %v37 = vadd.s32 %v33, 24
    %v38 = vsel %vm36, %v37, %v33
    %v39 = vld [vmem:[%s0] sm:$0xff]
    %40 = vrot.lane.b32.xlu0 %v39, 4
    %v41 = vpop.permute.xlu0 %40
    %vm42 = vcmp.ge.s32.totalorder %v38, 4
    %v43 = vsel %vm42, 1, 0
    %vm44 = vcmp.eq.s32.totalorder %v43, 1
    %v45 = vsel %vm44, %v41, 0.0
    %46 = vrot.lane.b32.xlu0 %v39, 2
    %v47 = vpop.permute.xlu0 %46
    %vm48 = vcmp.ge.s32.totalorder %v38, 2
    %v49 = vsel %vm48, 1, 0
    %vm50 = vcmp.eq.s32.totalorder %v49, 1
    %v51 = vsel %vm50, %v47, 0.0
    %v52 = vld [vmem:[%s1] sm:$0xff]
    %v53 = vld [vmem:[%s1 + $0x8] sm:$0xff]
    %v54 = vld [vmem:[%s1 + $0x10] sm:$0xff]
    %v55 = vld [vmem:[%s1 + $0x18] sm:$0xff]
    %v56 = vld [vmem:[%s2] sm:$0xff]
    %v57 = vld [vmem:[%s2 + $0x8] sm:$0xff]
    %v58 = vld [vmem:[%s2 + $0x10] sm:$0xff]
    %v59 = vld [vmem:[%s2 + $0x18] sm:$0xff]
    %61 = vset.pattern.permute.xlu0 0
    %62 = vperm.xlu0 %61, %v56
    %v63 = vpop.permute.xlu0 %62
    %66 = vset.pattern.permute.xlu0 0
    %67 = vperm.xlu0 %66, %v57
    %v68 = vpop.permute.xlu0 %67
    %71 = vset.pattern.permute.xlu0 0
    %72 = vperm.xlu0 %71, %v58
    %v73 = vpop.permute.xlu0 %72
    %76 = vset.pattern.permute.xlu0 0
    %77 = vperm.xlu0 %76, %v59
    %v78 = vpop.permute.xlu0 %77
    %vm80 = vcmask 195584
    %v82 = vsel %vm80, %v52, 0
    %v85 = vsel %vm80, %v53, 0
    %v88 = vsel %vm80, %v54, 0
    %v91 = vsel %vm80, %v55, 0
    %93 = vmatprep.subr.mxu0 0.0
    %94 = vmatpush1.msra.mxu0 %v45
    %95 = vmatprep.subr.mxu0 0.0
    %96 = vmatpush1.msra.mxu0 %v51
    %97 = vmatprep.subr.mxu0 0.0
    %98 = vmatpush1.msra.mxu0 %v39
    %99 = vmatprep.subr.mxu0 0.0
    %100 = vmatpush1.msra.mxu0 0.0
    %101 = vmatprep.subr.mxu0 0.0
    %102 = vmatpush1.msra.mxu0 0.0
    %103 = vmatprep.subr.mxu0 0.0
    %104 = vmatpush1.msra.mxu0 0.0
    %105 = vmatprep.subr.mxu0 0.0
    %106 = vmatpush1.msra.mxu0 0.0
    %107 = vmatprep.subr.mxu0 0.0
    %108 = vmatpush1.msra.mxu0 0.0
    %109 = vmatprep.subr.mxu0 0.0
    %110 = vmatpush1.msra.mxu0 0.0
    %111 = vmatprep.subr.mxu0 0.0
    %112 = vmatpush1.msra.mxu0 0.0
    %113 = vmatprep.subr.mxu0 0.0
    %114 = vmatpush1.msra.mxu0 0.0
    %115 = vmatprep.subr.mxu0 0.0
    %116 = vmatpush1.msra.mxu0 0.0
    %117 = vmatprep.subr.mxu0 0.0
    %118 = vmatpush1.msra.mxu0 0.0
    %119 = vmatprep.subr.mxu0 0.0
    %120 = vmatpush1.msra.mxu0 0.0
    %121 = vmatprep.subr.mxu0 0.0
    %122 = vmatpush1.msra.mxu0 0.0
    %123 = vmatprep.subr.mxu0 0.0
    %124 = vmatpush1.msra.mxu0 0.0
    %125 = vmatprep.subr.mxu0 0.0
    %126 = vmatpush1.msra.mxu0 0.0
    %127 = vmatprep.subr.mxu0 0.0
    %128 = vmatpush1.msra.mxu0 0.0
    %129 = vmatprep.subr.mxu0 0.0
    %130 = vmatpush1.msra.mxu0 0.0
    %131 = vmatprep.subr.mxu0 0.0
    %132 = vmatpush1.msra.mxu0 0.0
    %133 = vmatprep.subr.mxu0 0.0
    %134 = vmatpush1.msra.mxu0 0.0
    %135 = vmatprep.subr.mxu0 0.0
    %136 = vmatpush1.msra.mxu0 0.0
    %137 = vmatprep.subr.mxu0 0.0
    %138 = vmatpush1.msra.mxu0 0.0
    %139 = vmatprep.subr.mxu0 0.0
    %140 = vmatpush1.msra.mxu0 0.0
    %141 = vmatprep.subr.mxu0 0.0
    %142 = vmatpush1.msra.mxu0 0.0
    %143 = vmatprep.subr.mxu0 0.0
    %144 = vmatpush1.msra.mxu0 0.0
    %145 = vmatprep.subr.mxu0 0.0
    %146 = vmatpush1.msra.mxu0 0.0
    %147 = vmatprep.subr.mxu0 0.0
    %148 = vmatpush1.msra.mxu0 0.0
    %149 = vmatprep.subr.mxu0 0.0
    %150 = vmatpush1.msra.mxu0 0.0
    %151 = vmatprep.subr.mxu0 0.0
    %152 = vmatpush1.msra.mxu0 0.0
    %153 = vmatprep.subr.mxu0 0.0
    %154 = vmatpush1.msra.mxu0 0.0
    %155 = vmatprep.subr.mxu0 0.0
    %156 = vmatpush1.msra.mxu0 0.0
    %157 = vmatprep.mubr.f32.mxu0 0.0
    %158 = vmatmul.mubr.f32.gmra.mrb[0].mxu0 %v82
    %v159 = vpop.f32.mrb[0].mxu0
    %v160 = vadd.f32 %v63, %v159
    %v161 = vpop.f32.mrb[0].mxu0
    %162 = vmatprep.mubr.f32.mxu0 0.0
    %163 = vmatmul.mubr.f32.gmra.mrb[0].mxu0 %v85
    %v164 = vpop.f32.mrb[0].mxu0
    %v165 = vadd.f32 %v68, %v164
    %v166 = vpop.f32.mrb[0].mxu0
    %167 = vmatprep.mubr.f32.mxu0 0.0
    %168 = vmatmul.mubr.f32.gmra.mrb[0].mxu0 %v88
    %v169 = vpop.f32.mrb[0].mxu0
    %v170 = vadd.f32 %v73, %v169
    %v171 = vpop.f32.mrb[0].mxu0
    %172 = vmatprep.mubr.f32.mxu0 0.0
    %173 = vmatmul.mubr.f32.gmra.mrb[0].mxu0 %v91
    %v174 = vpop.f32.mrb[0].mxu0
    %v175 = vadd.f32 %v78, %v174
    %v176 = vpop.f32.mrb[0].mxu0
    %177 = vdwg.mxu0
    %v178 = vmax.f32 %v160, 0.0
    %v179 = vmax.f32 %v165, 0.0
    %180 = vrot.lane.b32.xlu0 %v178, 4
    %v181 = vpop.permute.xlu0 %180
    %182 = vrot.lane.b32.xlu0 %v179, 4
    %v183 = vpop.permute.xlu0 %182
    %v184 = vsel %vm44, %v181, 0.0
    %v185 = vsel %vm44, %v183, 0.0
    %186 = vrot.lane.b32.xlu0 %v178, 2
    %v187 = vpop.permute.xlu0 %186
    %188 = vrot.lane.b32.xlu0 %v179, 2
    %v189 = vpop.permute.xlu0 %188
    %v190 = vsel %vm50, %v187, 0.0
    %v191 = vsel %vm50, %v189, 0.0
    %v192 = vld [vmem:[%s3] sm:$0xff]
    %v193 = vld [vmem:[%s3 + $0x8] sm:$0xff]
    %v194 = vld [vmem:[%s4] sm:$0xff]
    %v195 = vld [vmem:[%s4 + $0x8] sm:$0xff]
    %197 = vset.pattern.permute.xlu0 0
    %198 = vperm.xlu0 %197, %v194
    %v199 = vpop.permute.xlu0 %198
    %202 = vset.pattern.permute.xlu0 0
    %203 = vperm.xlu0 %202, %v195
    %v204 = vpop.permute.xlu0 %203
    %vm206 = vcmask 392192
    %v208 = vsel %vm206, %v192, 0
    %v211 = vsel %vm206, %v193, 0
    %213 = vmatprep.subr.mxu0 0.0
    %214 = vmatpush1.msra.mxu0 %v184
    %215 = vmatprep.subr.mxu0 0.0
    %216 = vmatpush1.msra.mxu0 %v185
    %217 = vmatprep.subr.mxu0 0.0
    %218 = vmatpush1.msra.mxu0 %v190
    %219 = vmatprep.subr.mxu0 0.0
    %220 = vmatpush1.msra.mxu0 %v191
    %221 = vmatprep.subr.mxu0 0.0
    %222 = vmatpush1.msra.mxu0 %v178
    %223 = vmatprep.subr.mxu0 0.0
    %224 = vmatpush1.msra.mxu0 %v179
    %225 = vmatprep.subr.mxu0 0.0
    %226 = vmatpush1.msra.mxu0 0.0
    %227 = vmatprep.subr.mxu0 0.0
    %228 = vmatpush1.msra.mxu0 0.0
    %229 = vmatprep.subr.mxu0 0.0
    %230 = vmatpush1.msra.mxu0 0.0
    %231 = vmatprep.subr.mxu0 0.0
    %232 = vmatpush1.msra.mxu0 0.0
    %233 = vmatprep.subr.mxu0 0.0
    %234 = vmatpush1.msra.mxu0 0.0
    %235 = vmatprep.subr.mxu0 0.0
    %236 = vmatpush1.msra.mxu0 0.0
    %237 = vmatprep.subr.mxu0 0.0
    %238 = vmatpush1.msra.mxu0 0.0
    %239 = vmatprep.subr.mxu0 0.0
    %240 = vmatpush1.msra.mxu0 0.0
    %241 = vmatprep.subr.mxu0 0.0
    %242 = vmatpush1.msra.mxu0 0.0
    %243 = vmatprep.subr.mxu0 0.0
    %244 = vmatpush1.msra.mxu0 0.0
    %245 = vmatprep.subr.mxu0 0.0
    %246 = vmatpush1.msra.mxu0 0.0
    %247 = vmatprep.subr.mxu0 0.0
    %248 = vmatpush1.msra.mxu0 0.0
    %249 = vmatprep.subr.mxu0 0.0
    %250 = vmatpush1.msra.mxu0 0.0
    %251 = vmatprep.subr.mxu0 0.0
    %252 = vmatpush1.msra.mxu0 0.0
    %253 = vmatprep.subr.mxu0 0.0
    %254 = vmatpush1.msra.mxu0 0.0
    %255 = vmatprep.subr.mxu0 0.0
    %256 = vmatpush1.msra.mxu0 0.0
    %257 = vmatprep.subr.mxu0 0.0
    %258 = vmatpush1.msra.mxu0 0.0
    %259 = vmatprep.subr.mxu0 0.0
    %260 = vmatpush1.msra.mxu0 0.0
    %261 = vmatprep.subr.mxu0 0.0
    %262 = vmatpush1.msra.mxu0 0.0
    %263 = vmatprep.subr.mxu0 0.0
    %264 = vmatpush1.msra.mxu0 0.0
    %265 = vmatprep.subr.mxu0 0.0
    %266 = vmatpush1.msra.mxu0 0.0
    %267 = vmatprep.subr.mxu0 0.0
    %268 = vmatpush1.msra.mxu0 0.0
    %269 = vmatprep.subr.mxu0 0.0
    %270 = vmatpush1.msra.mxu0 0.0
    %271 = vmatprep.subr.mxu0 0.0
    %272 = vmatpush1.msra.mxu0 0.0
    %273 = vmatprep.subr.mxu0 0.0
    %274 = vmatpush1.msra.mxu0 0.0
    %275 = vmatprep.subr.mxu0 0.0
    %276 = vmatpush1.msra.mxu0 0.0
    %277 = vmatprep.mubr.f32.mxu0 0.0
    %278 = vmatmul.mubr.f32.gmra.mrb[0].mxu0 %v208
    %v279 = vpop.f32.mrb[0].mxu0
    %v280 = vadd.f32 %v199, %v279
    %v281 = vpop.f32.mrb[0].mxu0
    %282 = vmatprep.mubr.f32.mxu0 0.0
    %283 = vmatmul.mubr.f32.gmra.mrb[0].mxu0 %v211
    %v284 = vpop.f32.mrb[0].mxu0
    %v285 = vadd.f32 %v204, %v284
    %v286 = vpop.f32.mrb[0].mxu0
    %287 = vdwg.mxu0
    %v288 = vmax.f32 %v280, 0.0
    %v289 = vmax.f32 %v285, 0.0
    %v290 = vadd.f32 %v288, %v170
    %v291 = vadd.f32 %v289, %v175
    %v292 = vmax.f32 %v290, 0.0
    %v293 = vmax.f32 %v291, 0.0
    %294 = vst [vmem:[#allocation2] sm:$0xff] %v292
    %295 = vst [vmem:[#allocation2 + $0x8] sm:$0xff] %v293
    // Predicated region
    $region22: #{tpu_custom_call.1} parent=1 // pred_check
      _
    $region23: #{tpu_custom_call.1} parent=1 // pred_check_branch
      %297 = sbr.rel (0) target = $region25
    $region24: #{tpu_custom_call.1} parent=1 // pred_region
      %s299 = ssub.s32 256, 256
      %300 = vsyncadd [#allocation3], %s299
      %s301 = sshll.u32 [#allocation2], 4
      %s302 = int_to_ptr.vmem [resolvable:$true] %s301
      %307 = dma.vmem_to_hbm [thread:$0]  %s302, 256, %s5, [#allocation3], 128, 128, 8
    $region25: #{tpu_custom_call.1} parent=1 // pred_fallthru
      _
    // Predicated region
    $region26: #{tpu_custom_call.1} parent=1 // pred_check
      _
    $region27: #{tpu_custom_call.1} parent=1 // pred_check_branch
      %309 = sbr.rel (0) target = $region29
    $region28: #{tpu_custom_call.1} parent=1 // pred_region
      %310 = dma.done [#allocation3], 256
    $region29: #{tpu_custom_call.1} parent=1 // pred_fallthru
      _
    %311 = vsyncpa [#allocation3], 1

</llo_original>
